<compile_context>
chip_gen: v7x
topology: tpu7x:2x2x1
jax: 0.10.0
libtpu: 0.0.40
codegen_flags: <defaults>
</compile_context>

<pallas_src>
import jax
import jax.numpy as jnp
from jax import lax
from jax.experimental import pallas as pl
from jax.experimental.pallas import tpu as pltpu


def _round_up(x, m):
    return (x + m - 1) // m * m


def _tpu_generation():
    try:
        kind = jax.devices()[0].device_kind.lower()
    except Exception:
        return 0
    for g in (7, 6, 5, 4):
        if f"v{g}" in kind:
            return g
    return 0


_TPU_GEN = _tpu_generation()


# ---------------------------------------------------------------------------
# Static (non-traced) metadata container so params can be passed through jit.
# ---------------------------------------------------------------------------
class Static:
    """Hashable config container; registered as a leaf-less pytree."""

    def __init__(self, **kw):
        self._kw = tuple(sorted(kw.items()))
        self.__dict__.update(kw)

    def __hash__(self):
        return hash(self._kw)

    def __eq__(self, other):
        return isinstance(other, Static) and self._kw == other._kw

    def __repr__(self):
        return f"Static({dict(self._kw)})"


jax.tree_util.register_pytree_node(
    Static, lambda s: ((), s._kw), lambda aux, children: Static(**dict(aux)))


# ---------------------------------------------------------------------------
# Tile selection (VMEM-budget driven, generation aware)
# ---------------------------------------------------------------------------
# Single-K-step budget: double-buffered bf16 A(tm x tk) + B(tk x tn) tiles must
# stay well under the smallest scoped-VMEM default (16 MiB on v5e) with room
# left for the out / residual / shift pipeline buffers.
_VMEM_BUDGET_BYTES = 8 * 1024 * 1024
_TM_MAX, _TN_MAX = 128, 256
_TK_SINGLE_MAX = (_VMEM_BUDGET_BYTES // (2 * 2 * (_TM_MAX + _TN_MAX)) // 128) * 128
# -> 5376: K=2304 (layer3 conv2 x23, seg head) and K=4608 (layer4 conv2,
#    dec_c2 'up') run in one K step; K=9216 / 18432 stay tiled at tk=4608.


def _choose_tk(k_pad):
    if k_pad <= _TK_SINGLE_MAX:
        return k_pad
    t = _TK_SINGLE_MAX
    while t >= 128:
        if k_pad % t == 0:
            return t
        t -= 128
    return 128


def _choose_tn(n_pad, m_tiles):
    if n_pad % 256 != 0:
        return 128
    # v7x has 2 TensorCores: keep >=2 shardable parallel tiles when M gives one.
    if _TPU_GEN >= 7 and m_tiles == 1 and n_pad == 256:
        return 128
    return 256            # full 256-wide MXU occupancy on single-core v5e/v6e


def _choose_m_tiles(m):
    if m >= 128:
        return _round_up(m, 128), 128
    m_pad = _round_up(m, 8)
    return m_pad, m_pad


def _cost(flops, bytes_accessed):
    try:
        return pl.CostEstimate(flops=int(flops), transcendentals=0,
                               bytes_accessed=int(bytes_accessed))
    except Exception:                                     # older jax: optional
        return None


# ---------------------------------------------------------------------------
# Pallas GEMM kernel:  out = act( A@B + shift [+ residual] )
#   A, B are bf16, accumulation + epilogue in fp32; shift has the folded BN.
# ---------------------------------------------------------------------------
def _make_gemm_kernel(relu, has_res, k_steps):
    def kernel(a_ref, b_ref, c_ref, *rest):
        if has_res:
            r_ref = rest[0]
            rest = rest[1:]
        if k_steps == 1:
            o_ref = rest[0]
            y = jnp.dot(a_ref[...], b_ref[...],
                        preferred_element_type=jnp.float32)
            y = y + c_ref[...]
            if has_res:
                y = y + r_ref[...].astype(jnp.float32)
            if relu:
                y = jnp.maximum(y, 0.0)
            o_ref[...] = y.astype(o_ref.dtype)
        else:
            o_ref, acc_ref = rest

            @pl.when(pl.program_id(2) == 0)
            def _init():
                acc_ref[...] = jnp.zeros_like(acc_ref)

            acc_ref[...] += jnp.dot(a_ref[...], b_ref[...],
                                    preferred_element_type=jnp.float32)

            @pl.when(pl.program_id(2) == pl.num_programs(2) - 1)
            def _fini():
                y = acc_ref[...] + c_ref[...]
                if has_res:
                    y = y + r_ref[...].astype(jnp.float32)
                if relu:
                    y = jnp.maximum(y, 0.0)
                o_ref[...] = y.astype(o_ref.dtype)

    return kernel


def _pallas_gemm(a_p, b_p, c_p, r_p, *, tm, tn, tk, relu, has_res, out_dtype):
    m_pad, k_pad = a_p.shape
    n_pad = b_p.shape[1]
    k_steps = k_pad // tk

    bytes_acc = (a_p.size * a_p.dtype.itemsize + b_p.size * b_p.dtype.itemsize
                 + c_p.size * c_p.dtype.itemsize
                 + (r_p.size * r_p.dtype.itemsize if r_p is not None else 0)
                 + m_pad * n_pad * jnp.dtype(out_dtype).itemsize)
    cost = _cost(2 * m_pad * k_pad * n_pad, bytes_acc)

    if k_steps == 1:
        grid = (m_pad // tm, n_pad // tn)
        in_specs = [
            pl.BlockSpec((tm, tk), lambda i, j: (i, 0)),
            pl.BlockSpec((tk, tn), lambda i, j: (0, j)),
            pl.BlockSpec((1, tn), lambda i, j: (0, j)),
        ]
        if has_res:
            in_specs.append(pl.BlockSpec((tm, tn), lambda i, j: (i, j)))
        out_spec = pl.BlockSpec((tm, tn), lambda i, j: (i, j))
        scratch = []
        dimsem = ("parallel", "parallel")
    else:
        grid = (m_pad // tm, n_pad // tn, k_steps)
        in_specs = [
            pl.BlockSpec((tm, tk), lambda i, j, kk: (i, kk)),
            pl.BlockSpec((tk, tn), lambda i, j, kk: (kk, j)),
            pl.BlockSpec((1, tn), lambda i, j, kk: (0, j)),
        ]
        if has_res:
            in_specs.append(pl.BlockSpec((tm, tn), lambda i, j, kk: (i, j)))
        out_spec = pl.BlockSpec((tm, tn), lambda i, j, kk: (i, j))
        scratch = [pltpu.VMEM((tm, tn), jnp.float32)]
        dimsem = ("parallel", "parallel", "arbitrary")

    operands = [a_p, b_p, c_p] + ([r_p] if has_res else [])
    return pl.pallas_call(
        _make_gemm_kernel(relu, has_res, k_steps),
        out_shape=jax.ShapeDtypeStruct((m_pad, n_pad), out_dtype),
        grid_spec=pltpu.PrefetchScalarGridSpec(
            num_scalar_prefetch=0,
            grid=grid,
            in_specs=in_specs,
            out_specs=out_spec,
            scratch_shapes=scratch,
        ),
        compiler_params=pltpu.CompilerParams(dimension_semantics=dimsem),
        cost_estimate=cost,
    )(*operands)


def prepare_rhs(bmat, shift):
    """Pad/cast the GEMM RHS (K, N) to bf16 and the fp32 shift to (1, N_pad)."""
    k, n = bmat.shape
    k_pad = _round_up(k, 8) if k < 128 else _round_up(k, 128)
    n_pad = _round_up(n, 128)
    b_p = jnp.pad(bmat.astype(jnp.bfloat16), ((0, k_pad - k), (0, n_pad - n)))
    s_p = jnp.pad(shift.astype(jnp.float32), (0, n_pad - n)).reshape(1, n_pad)
    return dict(b=b_p, shift=s_p,
                meta=Static(k=k, n=n, k_pad=k_pad, n_pad=n_pad))


def fused_gemm(a, rhs, residual=None, relu=False, out_dtype=jnp.bfloat16,
               trim_n=False):
    """out = act(A @ B + shift [+ residual]); bf16 operands / fp32 epilogue.

    Returns the lane-padded (m, n_pad) result unless trim_n=True (callers carry
    the lane padding to skip slice + re-pad HBM round trips)."""
    gm = rhs["meta"]
    m, k = a.shape
    assert k == gm.k, (k, gm.k)
    m_pad, tm = _choose_m_tiles(m)
    tn = _choose_tn(gm.n_pad, m_pad // tm)
    tk = _choose_tk(gm.k_pad)

    a_p = a.astype(jnp.bfloat16)
    if (m_pad, gm.k_pad) != (m, k):
        a_p = jnp.pad(a_p, ((0, m_pad - m), (0, gm.k_pad - k)))

    r_p = None
    if residual is not None:
        rm, rn = residual.shape
        assert rm == m and rn <= gm.n_pad, (residual.shape, m, gm.n_pad)
        r_p = residual
        if (m_pad, gm.n_pad) != (rm, rn):
            r_p = jnp.pad(residual, ((0, m_pad - rm), (0, gm.n_pad - rn)))

    out = _pallas_gemm(a_p, rhs["b"], rhs["shift"], r_p,
                       tm=tm, tn=tn, tk=tk, relu=relu,
                       has_res=residual is not None, out_dtype=out_dtype)
    if m_pad != m:
        out = out[:m]
    if trim_n:
        out = out[:, :gm.n]
    return out


# ---------------------------------------------------------------------------
# Conv2d (+folded BN, +residual, +ReLU) in NHWC via (optional) im2col + GEMM
# ---------------------------------------------------------------------------
def apply_conv(p, x, relu, residual=None, out_dtype=jnp.bfloat16):
    cm = p["meta"]
    n, h, w, c_arr = x.shape
    assert c_arr == cm.cin_pad, (c_arr, cm.cin_pad)   # lane-padded carry width
    kh, kw, stride, pad = cm.kh, cm.kw, cm.stride, cm.padding
    ho = (h + 2 * pad - kh) // stride + 1
    wo = (w + 2 * pad - kw) // stride + 1

    if kh == 1 and kw == 1 and pad == 0:
        xs = x if stride == 1 else x[:, ::stride, ::stride, :]
        a = xs.reshape(n * ho * wo, c_arr)
    else:
        # TODO(synk): stream the k*k taps through the reduction grid instead of
        # materializing im2col (9x HBM amplification at large resolutions).
        xp = jnp.pad(x, ((0, 0), (pad, pad), (pad, pad), (0, 0)))
        cols = []
        for dy in range(kh):
            for dx in range(kw):
                cols.append(lax.slice(
                    xp, (0, dy, dx, 0),
                    (n, dy + (ho - 1) * stride + 1,
                     dx + (wo - 1) * stride + 1, c_arr),
                    (1, stride, stride, 1)))
        a = jnp.concatenate(cols, axis=-1).reshape(n * ho * wo, kh * kw * c_arr)

    res2d = None
    if residual is not None:
        assert residual.shape[-1] == cm.cout_pad
        res2d = residual.reshape(n * ho * wo, cm.cout_pad)
    y = fused_gemm(a, p["rhs"], residual=res2d, relu=relu, out_dtype=out_dtype)
    # Carry the lane padding (zero-filled channels) to the next layer.
    return y.reshape(n, ho, wo, cm.cout_pad)


def max_pool_3x3_s2_nhwc(x):
    # bf16 reduce_window (no fp32 round trip).  Kept in XLA; not the hot path.
    neg_inf = jnp.asarray(-jnp.inf, dtype=x.dtype)
    return lax.reduce_window(x, neg_inf, lax.max,
                             (1, 3, 3, 1), (1, 2, 2, 1),
                             ((0, 0), (1, 1), (1, 1), (0, 0)))


# ---------------------------------------------------------------------------
# Bilinear resize: one Pallas GEMM per call, batch on a grid axis.
#   out[b] = kron(Ah, Aw) @ x[b]   with x[b] flattened to (h*w, c).
# ---------------------------------------------------------------------------
def _interp_matrix(out_size, in_size, align_corners):
    i = jnp.arange(out_size, dtype=jnp.float32)
    if out_size == 1:
        src = jnp.zeros_like(i)
    elif align_corners:
        src = i * ((in_size - 1) / (out_size - 1))
    else:
        src = jnp.clip((i + 0.5) * (in_size / out_size) - 0.5,
                       0.0, float(in_size - 1))
    lo = jnp.clip(jnp.floor(src), 0, in_size - 1)
    frac = src - lo
    loi = lo.astype(jnp.int32)
    hii = jnp.clip(loi + 1, 0, in_size - 1)
    A = (jax.nn.one_hot(loi, in_size, dtype=jnp.float32) * (1.0 - frac)[:, None]
         + jax.nn.one_hot(hii, in_size, dtype=jnp.float32) * frac[:, None])
    return A  # (out_size, in_size)


def _resize_kernel(a_ref, x_ref, o_ref):
    o_ref[0] = jnp.dot(a_ref[...], x_ref[0],
                       preferred_element_type=jnp.float32).astype(o_ref.dtype)


def bilinear_resize_nhwc(x, h2, w2, align_corners):
    """2-D bilinear resize (matches the input dtype: bf16 for decoder features,
    fp32 for the final logits upsample).  TODO(synk): switch to separable H/W
    passes for large spatial sizes where kron(Ah, Aw) would not fit VMEM."""
    n, h, w, c = x.shape
    if (h, w) == (h2, w2):
        return x
    dt = x.dtype
    A = jnp.kron(_interp_matrix(h2, h, align_corners),
                 _interp_matrix(w2, w, align_corners)).astype(dt)  # (h2*w2, h*w)
    hw, hw2 = h * w, h2 * w2
    hw_pad = _round_up(hw, 8)
    if hw_pad != hw:
        A = jnp.pad(A, ((0, 0), (0, hw_pad - hw)))
    xf = x.reshape(n, hw, c)
    if hw_pad != hw:
        xf = jnp.pad(xf, ((0, 0), (0, hw_pad - hw), (0, 0)))

    th = hw2 if hw2 <= 1024 else 512
    while hw2 % th:
        th //= 2
    tc = min(c, 512)
    while c % tc:
        tc //= 2
    grid = (n, hw2 // th, c // tc)

    cost = _cost(2 * n * hw2 * hw_pad * c,
                 A.size * A.dtype.itemsize + xf.size * xf.dtype.itemsize
                 + n * hw2 * c * jnp.dtype(dt).itemsize)

    y = pl.pallas_call(
        _resize_kernel,
        out_shape=jax.ShapeDtypeStruct((n, hw2, c), dt),
        grid_spec=pltpu.PrefetchScalarGridSpec(
            num_scalar_prefetch=0,
            grid=grid,
            in_specs=[pl.BlockSpec((th, hw_pad), lambda b, i, j: (i, 0)),
                      pl.BlockSpec((1, hw_pad, tc), lambda b, i, j: (b, 0, j))],
            out_specs=pl.BlockSpec((1, th, tc), lambda b, i, j: (b, i, j)),
        ),
        compiler_params=pltpu.CompilerParams(
            dimension_semantics=("parallel", "parallel", "parallel")),
        cost_estimate=cost,
    )(A, xf)
    return y.reshape(n, h2, w2, c)


# ---------------------------------------------------------------------------
# Deterministic synthetic parameters (shapes follow the PyTorch __init__)
# ---------------------------------------------------------------------------
class ParamGen:
    def __init__(self, seed=0):
        self._key = jax.random.PRNGKey(seed)
        self._n = 0

    def _next(self):
        self._n += 1
        return jax.random.fold_in(self._key, self._n)

    def conv(self, cout, cin, kh, kw, bias=False):
        fan_in = cin * kh * kw
        w = jax.random.normal(self._next(), (cout, cin, kh, kw), jnp.float32)
        w = w * jnp.sqrt(2.0 / fan_in)
        b = (0.01 * jax.random.normal(self._next(), (cout,), jnp.float32)
             if bias else None)
        return w, b

    def bn(self, c):
        gamma = 1.0 + 0.05 * jax.random.normal(self._next(), (c,), jnp.float32)
        beta = 0.05 * jax.random.normal(self._next(), (c,), jnp.float32)
        mean = 0.05 * jax.random.normal(self._next(), (c,), jnp.float32)
        var = jnp.abs(1.0 + 0.05 * jax.random.normal(self._next(), (c,), jnp.float32))
        return gamma, beta, mean, var


def make_conv_bn(pg, cin, cout, k, stride=1, padding=0, conv_bias=False, bn=True,
                 cin_pad=None):
    if cin_pad is None:
        cin_pad = _round_up(cin, 128)     # carried lane-padded activation width
    w, b = pg.conv(cout, cin, k, k, bias=conv_bias)
    if bn:
        gamma, beta, mean, var = pg.bn(cout)
        scale = gamma / jnp.sqrt(var + 1e-5)
        shift = beta - mean * scale
        if b is not None:
            shift = shift + b * scale
    else:
        scale = jnp.ones((cout,), jnp.float32)
        shift = b if b is not None else jnp.zeros((cout,), jnp.float32)
    # Explicit zero rows for the carried channel padding (inert in the GEMM).
    w = jnp.pad(w, ((0, 0), (0, cin_pad - cin), (0, 0), (0, 0)))
    # NHWC weight matrix, rows ordered (dy, dx, cin_pad); BN scale folded in.
    bmat = w.transpose(2, 3, 1, 0).reshape(k * k * cin_pad, cout) * scale[None, :]
    return dict(rhs=prepare_rhs(bmat, shift),
                meta=Static(kh=k, kw=k, stride=stride, padding=padding,
                            cin=cin, cin_pad=cin_pad,
                            cout=cout, cout_pad=_round_up(cout, 128)))


# ----------------------------- ResNet-101 backbone ------------------------
def make_bottleneck(pg, cin, planes, stride):
    cout = planes * 4
    return dict(
        conv1=make_conv_bn(pg, cin, planes, 1),
        conv2=make_conv_bn(pg, planes, planes, 3, stride=stride, padding=1),
        conv3=make_conv_bn(pg, planes, cout, 1),
        down=(make_conv_bn(pg, cin, cout, 1, stride=stride)
              if (stride != 1 or cin != cout) else None))


def apply_bottleneck(blk, x):
    identity = x if blk["down"] is None else apply_conv(blk["down"], x, relu=False)
    out = apply_conv(blk["conv1"], x, relu=True)
    out = apply_conv(blk["conv2"], out, relu=True)
    # relu(bn3(conv3(out)) + identity) fused in the Pallas epilogue
    return apply_conv(blk["conv3"], out, relu=True, residual=identity)


def make_resnet101(pg):
    stem = make_conv_bn(pg, 3, 64, 7, stride=2, padding=3, cin_pad=3)
    layers = []
    cin = 64
    for planes, nblocks, stride in [(64, 3, 1), (128, 4, 2), (256, 23, 2), (512, 3, 2)]:
        blocks = []
        for i in range(nblocks):
            blocks.append(make_bottleneck(pg, cin, planes, stride if i == 0 else 1))
            cin = planes * 4
        layers.append(blocks)
    return dict(stem=stem, layers=layers)


def apply_resnet(net, x):
    x = apply_conv(net["stem"], x, relu=True)
    x = max_pool_3x3_s2_nhwc(x)
    feats = []
    for blocks in net["layers"]:
        # TODO(synk): fuse each stage (esp. layer3's 23 identical blocks) into a
        # single pallas_call with stacked per-block weights + VMEM-resident acts.
        for blk in blocks:
            x = apply_bottleneck(blk, x)
        feats.append(x)
    return feats  # [c2(256), c3(512), c4(1024), c5(2048)] in NHWC


# ----------------------------- Decoder / head -----------------------------
def make_combination(pg, c_low, c_up):
    return dict(
        up=make_conv_bn(pg, c_low, c_up, 3, stride=1, padding=1, conv_bias=True),
        cat=make_conv_bn(pg, c_up * 2, c_up, 1, conv_bias=True))


def apply_combination(mod, x_low, x_up):
    x_low = bilinear_resize_nhwc(x_low, x_up.shape[1], x_up.shape[2],
                                 align_corners=False)
    x_low = apply_conv(mod["up"], x_low, relu=True)
    x = jnp.concatenate([x_up, x_low], axis=-1)
    return apply_conv(mod["cat"], x, relu=True)


def make_seg_head(pg, num_classes):
    return dict(
        conv1=make_conv_bn(pg, 256, 256, 3, padding=1),
        conv2=make_conv_bn(pg, 256, 256, 3, padding=1),
        conv3=make_conv_bn(pg, 256, num_classes, 1, conv_bias=True, bn=False))


def apply_seg_head(h, x):
    # Dropout(0.5) / Dropout(0.1) are identity in eval mode.
    x = apply_conv(h["conv1"], x, relu=True)
    x = apply_conv(h["conv2"], x, relu=True)
    return apply_conv(h["conv3"], x, relu=False, out_dtype=jnp.float32)


# ----------------------------- CTRSEG forward -----------------------------
def make_ctrseg(pg, num_classes):
    return dict(
        backbone=make_resnet101(pg),
        dec_c2=make_combination(pg, 512, 256),
        dec_c3=make_combination(pg, 1024, 512),
        dec_c4=make_combination(pg, 2048, 1024),
        seg_head=make_seg_head(pg, num_classes))


def ctrseg_forward(params, x):
    n, c, h, w = x.shape
    x = jnp.transpose(x, (0, 2, 3, 1)).astype(jnp.bfloat16)       # NCHW -> NHWC
    feats = apply_resnet(params["backbone"], x)
    c4_combine = apply_combination(params["dec_c4"], feats[-1], feats[-2])
    c3_combine = apply_combination(params["dec_c3"], c4_combine, feats[-3])
    c2_combine = apply_combination(params["dec_c2"], c3_combine, feats[-4])
    y = apply_seg_head(params["seg_head"], c2_combine)            # fp32, lane-padded
    # Final align_corners=True upsample stays fully in fp32 (logit precision).
    y = bilinear_resize_nhwc(y, h, w, align_corners=True)
    nclass = params["seg_head"]["conv3"]["meta"].cout
    return jnp.transpose(y[..., :nclass], (0, 3, 1, 2)).astype(jnp.float32)


if __name__ == "__main__":
    num_classes = 5
    key = jax.random.PRNGKey(0)
    k_in, k_a, k_b, k_r = jax.random.split(key, 4)

    # --- self-check of the fused Pallas GEMM (bf16 operands, fp32 epilogue) ---
    a = jax.random.normal(k_a, (37, 100), jnp.float32)
    b = jax.random.normal(k_b, (100, 50), jnp.float32)
    s = jnp.linspace(0.5, 1.5, 50, dtype=jnp.float32)
    t = jnp.linspace(-0.2, 0.2, 50, dtype=jnp.float32)
    r = jax.random.normal(k_r, (37, 50), jnp.float32)
    rhs = prepare_rhs(b * s[None, :], t)                # scale folded into RHS
    got = fused_gemm(a, rhs, residual=r, relu=True,
                     out_dtype=jnp.float32, trim_n=True)
    a_bf = a.astype(jnp.bfloat16).astype(jnp.float32)
    b_bf = (b * s[None, :]).astype(jnp.bfloat16).astype(jnp.float32)
    ref = jnp.maximum(a_bf @ b_bf + t[None, :] + r, 0.0)
    assert jnp.allclose(got, ref, rtol=1e-2, atol=1e-2), \
        float(jnp.max(jnp.abs(got - ref)))

    # --- self-check of the Pallas 2-D bilinear resize ---
    xr = jax.random.normal(k_a, (2, 4, 4, 128), jnp.float32)
    yr = bilinear_resize_nhwc(xr, 8, 8, align_corners=True)
    Ah = _interp_matrix(8, 4, True)
    ref_r = jnp.einsum('ai,bj,nijc->nabc', Ah, Ah, xr)
    assert jnp.allclose(yr, ref_r, rtol=1e-3, atol=1e-3)

    # --- full network (bf16 activations -> expect ~1e-2-level deviation vs an
    #     fp32 PyTorch reference; that is precision, not a bug) ---
    x = jax.random.normal(k_in, (2, 3, 64, 64), jnp.float32)
    pg = ParamGen(seed=0)
    params = make_ctrseg(pg, num_classes)

    fwd = jax.jit(ctrseg_forward)
    out = fwd(params, x)
    out = jax.block_until_ready(out)
    assert out.shape == (2, num_classes, 64, 64), out.shape
    assert bool(jnp.all(jnp.isfinite(out)))
    print("KERNEL_OK")
</pallas_src>

<mosaic_0001>
module attributes {stable_mosaic.version = 11 : i64} {
  func.func @kernel(%arg0: i32, %arg1: i32, %arg2: memref<40x104xbf16, #tpu.memory_space<vmem>>, %arg3: memref<104x128xbf16, #tpu.memory_space<vmem>>, %arg4: memref<1x128xf32, #tpu.memory_space<vmem>>, %arg5: memref<40x128xf32, #tpu.memory_space<vmem>>, %arg6: memref<40x128xf32, #tpu.memory_space<vmem>>) attributes {dimension_semantics = [#tpu.dimension_semantics<parallel>, #tpu.dimension_semantics<parallel>], iteration_bounds = array<i64: 1, 1>, scalar_prefetch = 0 : i64, scratch_operands = 0 : i64, tpu.core_type = #tpu.core_type<tc>, window_params = [{transform_indices = @transform_0, window_bounds = array<i64: 40, 104>}, {transform_indices = @transform_1, window_bounds = array<i64: 104, 128>}, {transform_indices = @transform_2, window_bounds = array<i64: 1, 128>}, {transform_indices = @transform_3, window_bounds = array<i64: 40, 128>}, {transform_indices = @transform_4, window_bounds = array<i64: 40, 128>}]} {
    %c0 = arith.constant 0 : index
    %c0_0 = arith.constant 0 : index
    %0 = vector.load %arg2[%c0, %c0_0] : memref<40x104xbf16, #tpu.memory_space<vmem>>, vector<40x104xbf16>
    %c0_1 = arith.constant 0 : index
    %c0_2 = arith.constant 0 : index
    %1 = vector.load %arg3[%c0_1, %c0_2] : memref<104x128xbf16, #tpu.memory_space<vmem>>, vector<104x128xbf16>
    %cst = arith.constant dense<0.000000e+00> : vector<40x128xf32>
    %2 = tpu.matmul %0, %1, %cst {dimension_numbers = #tpu.dot_dimension_numbers<[1], [0], [0], [1], [0, 0, 1, 1], [], []>} : vector<40x104xbf16>, vector<104x128xbf16>, vector<40x128xf32> -> vector<40x128xf32>
    %c0_3 = arith.constant 0 : index
    %c0_4 = arith.constant 0 : index
    %3 = vector.load %arg4[%c0_3, %c0_4] : memref<1x128xf32, #tpu.memory_space<vmem>>, vector<1x128xf32>
    %4 = vector.broadcast %3 : vector<1x128xf32> to vector<40x128xf32>
    %5 = arith.addf %2, %4 : vector<40x128xf32>
    %c0_5 = arith.constant 0 : index
    %c0_6 = arith.constant 0 : index
    %6 = vector.load %arg5[%c0_5, %c0_6] : memref<40x128xf32, #tpu.memory_space<vmem>>, vector<40x128xf32>
    %7 = arith.addf %5, %6 : vector<40x128xf32>
    %cst_7 = arith.constant 0.000000e+00 : f32
    %8 = vector.broadcast %cst_7 : f32 to vector<40x128xf32>
    %9 = arith.maximumf %7, %8 : vector<40x128xf32>
    %c0_8 = arith.constant 0 : index
    %c0_9 = arith.constant 0 : index
    %10 = vector.load %arg6[%c0_8, %c0_9] : memref<40x128xf32, #tpu.memory_space<vmem>>, vector<40x128xf32>
    tpu.vector_store %arg6[%c0_8, %c0_9], %9 {strides = array<i32>} : memref<40x128xf32, #tpu.memory_space<vmem>>, vector<40x128xf32>,
    return
  }
  func.func @transform_0(%arg0: i32, %arg1: i32) -> (i32, i32) {
    %c0_i32 = arith.constant 0 : i32
    %c0_i32_0 = arith.constant 0 : i32
    return %arg0, %c0_i32 : i32, i32
  }
  func.func @transform_1(%arg0: i32, %arg1: i32) -> (i32, i32) {
    %c0_i32 = arith.constant 0 : i32
    %c0_i32_0 = arith.constant 0 : i32
    return %c0_i32, %arg1 : i32, i32
  }
  func.func @transform_2(%arg0: i32, %arg1: i32) -> (i32, i32) {
    %c0_i32 = arith.constant 0 : i32
    %c0_i32_0 = arith.constant 0 : i32
    return %c0_i32, %arg1 : i32, i32
  }
  func.func @transform_3(%arg0: i32, %arg1: i32) -> (i32, i32) {
    %c0_i32 = arith.constant 0 : i32
    return %arg0, %arg1 : i32, i32
  }
  func.func @transform_4(%arg0: i32, %arg1: i32) -> (i32, i32) {
    %c0_i32 = arith.constant 0 : i32
    return %arg0, %arg1 : i32, i32
  }
}

</mosaic_0001>

<llo_original>
// kernel: tpu_custom_call.1
$region0: #{tpu_custom_call.1}
  #allocation0 [shape = 'u32[]', space=smem, size = 0x4, offset = 0x4, fixed_abs, tag = 'smem constant byte address 0x4 - core index']
  #allocation1 [shape = 'u32[144,128]{1,0:T(1,128)}', space=vmem, size = 0x12000, scoped, tag = 'internal scratch']
  %s0 = inlined_call_operand.hbm [shape: bf16[40,104], index: 0, kind: input, shape index: {}]
  %s1 = inlined_call_operand.hbm [shape: bf16[104,128], index: 1, kind: input, shape index: {}]
  %s2 = inlined_call_operand.vmem [shape: f32[1,128], index: 2, kind: input, shape index: {}]
  %s3 = inlined_call_operand.hbm [shape: f32[40,128], index: 3, kind: input, shape index: {}]
  %s4 = inlined_call_operand.hbm [shape: f32[40,128], index: 4, kind: output, shape index: {}]
  %s5 = sld [smem:[#allocation0]]
  $region38: #{tpu_custom_call.1} parent=0
    _
  %s7 = ssub.s32 1, %s5
  %s8 = scalar_select 0, %s7, %s5
  $region1: #{tpu_custom_call.1} parent=0
    #allocation2 [shape = 'u8[10240]{0}', space=vmem, size = 0x2800, scoped, tag = 'input window, operand 0, single buffered']
    #allocation3 [shape = 's32[1]{0}', space=sflag, size = 0x4, scoped, tag = 'scoped memory for tpu_custom_call.1']
    #allocation4 [shape = 's32[1]{0}', space=sflag, size = 0x4, scoped, tag = 'scoped memory for tpu_custom_call.1']
    #allocation5 [shape = 'u8[26624]{0}', space=vmem, size = 0x6800, scoped, tag = 'input window, operand 1, single buffered']
    #allocation6 [shape = 's32[1]{0}', space=sflag, size = 0x4, scoped, tag = 'scoped memory for tpu_custom_call.1']
    #allocation7 [shape = 'u8[20480]{0}', space=vmem, size = 0x5000, scoped, tag = 'input window, operand 3, single buffered']
    #allocation8 [shape = 'u8[20480]{0}', space=vmem, size = 0x5000, scoped, tag = 'output window, operand 0, single buffered']
    %9 = vsyncpa [#allocation3], 0
    %10 = vsyncpa [#allocation6], 0
    %11 = vsyncpa [#allocation4], 0
    // Predicated region
    $region2: #{tpu_custom_call.1} parent=1 // pred_check
      _
    $region3: #{tpu_custom_call.1} parent=1 // pred_check_branch
      %13 = sbr.rel (0) target = $region5
    $region4: #{tpu_custom_call.1} parent=1 // pred_region
      %s15 = ssub.s32 320, 320
      %16 = vsyncadd [#allocation3], %s15
      %s17 = sshll.u32 [#allocation2], 4
      %s18 = int_to_ptr.vmem [resolvable:$true] %s17
      %23 = dma.hbm_to_vmem [thread:$0]  %s0, 320, %s18, [#allocation3], 64, 64, 4
    $region5: #{tpu_custom_call.1} parent=1 // pred_fallthru
      _
    // Predicated region
    $region6: #{tpu_custom_call.1} parent=1 // pred_check
      _
    $region7: #{tpu_custom_call.1} parent=1 // pred_check_branch
      %25 = sbr.rel (0) target = $region9
    $region8: #{tpu_custom_call.1} parent=1 // pred_region
      %s27 = ssub.s32 832, 832
      %28 = vsyncadd [#allocation6], %s27
      %s29 = sshll.u32 [#allocation5], 4
      %s30 = int_to_ptr.vmem [resolvable:$true] %s29
      %35 = dma.hbm_to_vmem [thread:$0]  %s1, 832, %s30, [#allocation6], 64, 64, 4
    $region9: #{tpu_custom_call.1} parent=1 // pred_fallthru
      _
    // Predicated region
    $region10: #{tpu_custom_call.1} parent=1 // pred_check
      _
    $region11: #{tpu_custom_call.1} parent=1 // pred_check_branch
      %37 = sbr.rel (0) target = $region13
    $region12: #{tpu_custom_call.1} parent=1 // pred_region
      _
    $region13: #{tpu_custom_call.1} parent=1 // pred_fallthru
      _
    // Predicated region
    $region14: #{tpu_custom_call.1} parent=1 // pred_check
      _
    $region15: #{tpu_custom_call.1} parent=1 // pred_check_branch
      %39 = sbr.rel (0) target = $region17
    $region16: #{tpu_custom_call.1} parent=1 // pred_region
      %s41 = ssub.s32 640, 640
      %42 = vsyncadd [#allocation6], %s41
      %s43 = sshll.u32 [#allocation7], 4
      %s44 = int_to_ptr.vmem [resolvable:$true] %s43
      %49 = dma.hbm_to_vmem [thread:$0]  %s3, 640, %s44, [#allocation6], 128, 128, 8
    $region17: #{tpu_custom_call.1} parent=1 // pred_fallthru
      _
    // Predicated region
    $region18: #{tpu_custom_call.1} parent=1 // pred_check
      _
    $region19: #{tpu_custom_call.1} parent=1 // pred_check_branch
      %51 = sbr.rel (0) target = $region21
    $region20: #{tpu_custom_call.1} parent=1 // pred_region
      %52 = dma.done [#allocation3], 320
    $region21: #{tpu_custom_call.1} parent=1 // pred_fallthru
      _
    // Predicated region
    $region22: #{tpu_custom_call.1} parent=1 // pred_check
      _
    $region23: #{tpu_custom_call.1} parent=1 // pred_check_branch
      %54 = sbr.rel (0) target = $region25
    $region24: #{tpu_custom_call.1} parent=1 // pred_region
      %55 = dma.done [#allocation6], 832
    $region25: #{tpu_custom_call.1} parent=1 // pred_fallthru
      _
    // Predicated region
    $region26: #{tpu_custom_call.1} parent=1 // pred_check
      _
    $region27: #{tpu_custom_call.1} parent=1 // pred_check_branch
      %57 = sbr.rel (0) target = $region29
    $region28: #{tpu_custom_call.1} parent=1 // pred_region
      %58 = dma.done [#allocation6], 640
    $region29: #{tpu_custom_call.1} parent=1 // pred_fallthru
      _
    %v60 = vld [vmem:[#allocation2] sm:$0xf]
    %v61 = vld [vmem:[#allocation2 + $0x4] sm:$0xf]
    %v62 = vld [vmem:[#allocation2 + $0x8] sm:$0xf]
    %v63 = vld [vmem:[#allocation2 + $0xc] sm:$0xf]
    %v64 = vld [vmem:[#allocation2 + $0x10] sm:$0xf]
    %v65 = vld [vmem:[#allocation5] sm:$0xf]
    %v66 = vld [vmem:[#allocation5 + $0x4] sm:$0xf]
    %v67 = vld [vmem:[#allocation5 + $0x8] sm:$0xf]
    %v68 = vld [vmem:[#allocation5 + $0xc] sm:$0xf]
    %v69 = vld [vmem:[#allocation5 + $0x10] sm:$0xf]
    %v70 = vld [vmem:[#allocation5 + $0x14] sm:$0xf]
    %v71 = vld [vmem:[#allocation5 + $0x18] sm:$0xf]
    %v72 = vld [vmem:[#allocation5 + $0x1c] sm:$0xf]
    %v73 = vld [vmem:[#allocation5 + $0x20] sm:$0xf]
    %v74 = vld [vmem:[#allocation5 + $0x24] sm:$0xf]
    %v75 = vld [vmem:[#allocation5 + $0x28] sm:$0xf]
    %v76 = vld [vmem:[#allocation5 + $0x2c] sm:$0xf]
    %v77 = vld [vmem:[#allocation5 + $0x30] sm:$0xf]
    %v78 = vld [vmem:[%s2] sm:$0x1]
    %v80 = vlaneseq
    %v81 = vshrl.u32 %v80, 7
    %v82 = vsub.s32 0, %v81
    %v83 = vrot.slane %v78, %v82
    %v90 = vunpack.c.l.b16 %v60
    %v91 = vunpack.c.l.b16 %v61
    %v92 = vunpack.c.l.b16 %v62
    %v93 = vunpack.c.l.b16 %v63
    %v94 = vunpack.c.l.b16 %v64
    %v95 = vpack.c.b16 %v91, %v90
    %v96 = vpack.c.b16 %v93, %v92
    %v97 = vpack.c.b16 %v94, %v94
    %v111 = vunpack.c.l.b16 %v65
    %v112 = vunpack.c.l.b16 %v66
    %v113 = vunpack.c.l.b16 %v67
    %v114 = vunpack.c.l.b16 %v68
    %v115 = vunpack.c.l.b16 %v69
    %v116 = vunpack.c.l.b16 %v70
    %v117 = vunpack.c.l.b16 %v71
    %v118 = vunpack.c.l.b16 %v72
    %v119 = vunpack.c.l.b16 %v73
    %v120 = vunpack.c.l.b16 %v74
    %v121 = vunpack.c.l.b16 %v75
    %v122 = vunpack.c.l.b16 %v76
    %v123 = vunpack.c.l.b16 %v77
    %v124 = vpack.c.b16 %v112, %v111
    %v125 = vpack.c.b16 %v114, %v113
    %v126 = vpack.c.b16 %v116, %v115
    %v127 = vpack.c.b16 %v118, %v117
    %v128 = vpack.c.b16 %v120, %v119
    %v129 = vpack.c.b16 %v122, %v121
    %v130 = vpack.c.b16 %v123, %v123
    %vm137 = vcmask 850944
    %v139 = vsel %vm137, %v95, 0
    %v142 = vsel %vm137, %v96, 0
    %v145 = vsel %vm137, %v97, 0
    %vm147 = vcmask 1043456
    %v149 = vsel %vm147, %v130, 0
    %151 = vmatprep.subr.bf16.mxu0 0
    %152 = vmatpush1.bf16.msra.mxu0 %v124
    %153 = vmatprep.subr.bf16.mxu0 0
    %154 = vmatpush1.bf16.msra.mxu0 %v125
    %155 = vmatprep.subr.bf16.mxu0 0
    %156 = vmatpush1.bf16.msra.mxu0 %v126
    %157 = vmatprep.subr.bf16.mxu0 0
    %158 = vmatpush1.bf16.msra.mxu0 %v127
    %159 = vmatprep.subr.bf16.mxu0 0
    %160 = vmatpush1.bf16.msra.mxu0 %v128
    %161 = vmatprep.subr.bf16.mxu0 0
    %162 = vmatpush1.bf16.msra.mxu0 %v129
    %163 = vmatprep.subr.bf16.mxu0 0
    %164 = vmatpush1.bf16.msra.mxu0 %v149
    %165 = vmatprep.subr.bf16.mxu0 0
    %166 = vmatpush1.bf16.msra.mxu0 0
    %167 = vmatprep.subr.bf16.mxu0 0
    %168 = vmatpush1.bf16.msra.mxu0 0
    %169 = vmatprep.subr.bf16.mxu0 0
    %170 = vmatpush1.bf16.msra.mxu0 0
    %171 = vmatprep.subr.bf16.mxu0 0
    %172 = vmatpush1.bf16.msra.mxu0 0
    %173 = vmatprep.subr.bf16.mxu0 0
    %174 = vmatpush1.bf16.msra.mxu0 0
    %175 = vmatprep.subr.bf16.mxu0 0
    %176 = vmatpush1.bf16.msra.mxu0 0
    %177 = vmatprep.subr.bf16.mxu0 0
    %178 = vmatpush1.bf16.msra.mxu0 0
    %179 = vmatprep.subr.bf16.mxu0 0
    %180 = vmatpush1.bf16.msra.mxu0 0
    %181 = vmatprep.subr.bf16.mxu0 0
    %182 = vmatpush1.bf16.msra.mxu0 0
    %183 = vmatprep.mubr.bf16.mxu0 0
    %184 = vmatmul.mubr.bf16.gmra.mrb[0].mxu0 %v139
    %v185 = vpop.f32.mrb[0].mxu0
    %v186 = vadd.f32 %v83, %v185
    %v187 = vpop.f32.mrb[0].mxu0
    %v188 = vpop.f32.mrb[0].mxu0
    %v189 = vadd.f32 %v83, %v188
    %v190 = vpop.f32.mrb[0].mxu0
    %191 = vmatprep.mubr.bf16.mxu0 0
    %192 = vmatmul.mubr.bf16.gmra.mrb[0].mxu0 %v142
    %v193 = vpop.f32.mrb[0].mxu0
    %v194 = vadd.f32 %v83, %v193
    %v195 = vpop.f32.mrb[0].mxu0
    %v196 = vpop.f32.mrb[0].mxu0
    %v197 = vadd.f32 %v83, %v196
    %v198 = vpop.f32.mrb[0].mxu0
    %199 = vmatprep.mubr.bf16.mxu0 0
    %200 = vmatmul.mubr.bf16.gmra.mrb[0].mxu0 %v145
    %v201 = vpop.f32.mrb[0].mxu0
    %v202 = vadd.f32 %v83, %v201
    %v203 = vpop.f32.mrb[0].mxu0
    %v204 = vpop.f32.mrb[0].mxu0
    %v205 = vpop.f32.mrb[0].mxu0
    %206 = vdwg.mxu0
    %v207 = vld [vmem:[#allocation7] sm:$0xff]
    %v208 = vld [vmem:[#allocation7 + $0x8] sm:$0xff]
    %v209 = vld [vmem:[#allocation7 + $0x10] sm:$0xff]
    %v210 = vld [vmem:[#allocation7 + $0x18] sm:$0xff]
    %v211 = vld [vmem:[#allocation7 + $0x20] sm:$0xff]
    %v212 = vadd.f32 %v186, %v207
    %v213 = vadd.f32 %v189, %v208
    %v214 = vadd.f32 %v194, %v209
    %v215 = vadd.f32 %v197, %v210
    %v216 = vadd.f32 %v202, %v211
    %v217 = vmax.f32 %v212, 0.0
    %v218 = vmax.f32 %v213, 0.0
    %v219 = vmax.f32 %v214, 0.0
    %v220 = vmax.f32 %v215, 0.0
    %v221 = vmax.f32 %v216, 0.0
    %222 = vst [vmem:[#allocation8] sm:$0xff] %v217
    %223 = vst [vmem:[#allocation8 + $0x8] sm:$0xff] %v218
    %224 = vst [vmem:[#allocation8 + $0x10] sm:$0xff] %v219
    %225 = vst [vmem:[#allocation8 + $0x18] sm:$0xff] %v220
    %226 = vst [vmem:[#allocation8 + $0x20] sm:$0xff] %v221
    // Predicated region
    $region30: #{tpu_custom_call.1} parent=1 // pred_check
      _
    $region31: #{tpu_custom_call.1} parent=1 // pred_check_branch
      %228 = sbr.rel (0) target = $region33
    $region32: #{tpu_custom_call.1} parent=1 // pred_region
      %s230 = ssub.s32 640, 640
      %231 = vsyncadd [#allocation4], %s230
      %s232 = sshll.u32 [#allocation8], 4
      %s233 = int_to_ptr.vmem [resolvable:$true] %s232
      %238 = dma.vmem_to_hbm [thread:$0]  %s233, 640, %s4, [#allocation4], 128, 128, 8
    $region33: #{tpu_custom_call.1} parent=1 // pred_fallthru
      _
    // Predicated region
    $region34: #{tpu_custom_call.1} parent=1 // pred_check
      _
    $region35: #{tpu_custom_call.1} parent=1 // pred_check_branch
      %240 = sbr.rel (0) target = $region37
    $region36: #{tpu_custom_call.1} parent=1 // pred_region
      %241 = dma.done [#allocation4], 640
    $region37: #{tpu_custom_call.1} parent=1 // pred_fallthru
      _
    %242 = vsyncpa [#allocation3], 1
    %243 = vsyncpa [#allocation6], 1
    %244 = vsyncpa [#allocation4], 1

</llo_original>
